<compile_context>
chip_gen: v6e
topology: v6e:2x2x1
jax: 0.10.0
libtpu: 0.0.40
codegen_flags: <defaults>
</compile_context>

<pallas_src>
import functools
import math

import jax
import jax.numpy as jnp
from jax import lax
from jax.experimental import pallas as pl
from jax.experimental.pallas import tpu as pltpu

EPS = 1e-4          # elektronn3 DiceLoss default eps
_LANES = 128
_SUBLANES = 8
_CHUNK = _LANES * _SUBLANES   # 1024 pixels per inner step


def _combined_loss_kernel(logits_ref, target_ref, out_ref, *, approx_recip=False):
    """Fused CrossEntropy + Dice partial-sum reduction.

    Grid = (batch n [parallel], superblock sb [parallel], pixel-tile i [reduction]).

    logits_ref : VMEM (1, C, S, 128) float  -- S*128 pixels of one batch row
    target_ref : VMEM (1, 1, S, 128) int32  -- integer class labels
    out_ref    : VMEM (1, 3*C+1, 8, 128) f32 partial sums, resident across i:
        rows [0,   C)  : per-class sum(p * onehot)     (Dice numerator)
        rows [C,  2C)  : per-class sum(p + onehot)     (Dice denominator, pre-eps)
        rows [2C, 3C)  : per-class sum(onehot * x)     (CE: picked logits)
        row   3C       : sum(logsumexp(x))             (CE: lse term)
    """
    i = pl.program_id(2)
    _, C, S, _ = logits_ref.shape
    n_full = S // _SUBLANES
    rem = S % _SUBLANES

    @pl.when(i == 0)
    def _():
        out_ref[...] = jnp.zeros_like(out_ref)

    # Loop-invariant class-index planes (C full vregs), hoisted out of the
    # chunk loop (JAX does not CSE broadcast_in_dim).
    class_iota = lax.broadcasted_iota(jnp.int32, (C, _SUBLANES, _LANES), 0)

    def chunk_stats(x, t, cls):
        # x: (C, s, 128) f32, t: (s, 128) i32, cls: (C, s, 128) i32.
        # Class axis is the leading (untiled) dim -> softmax max/sum over C are
        # elementwise VPU ops across full (s, 128) vreg planes (no XLU).
        onehot = (cls == t[None]).astype(jnp.float32)
        m = jnp.max(x, axis=0)                                    # (s, 128)
        e = jnp.exp(x - m[None])                                  # EUP
        ssum = jnp.sum(e, axis=0)                                 # (s, 128)
        p = e * pl.reciprocal(ssum, approx=approx_recip)[None]    # (C, s, 128)
        lse = m + jnp.log(ssum)                                   # (s, 128)
        return p * onehot, p + onehot, onehot * x, lse

    if C < 12:
        # Small class count: keep three (C,8,128) + one (8,128) f32 register
        # accumulators live and flush to the VMEM output block once per step.
        acc_i = jnp.zeros((C, _SUBLANES, _LANES), jnp.float32)
        acc_d = jnp.zeros((C, _SUBLANES, _LANES), jnp.float32)
        acc_t = jnp.zeros((C, _SUBLANES, _LANES), jnp.float32)
        acc_l = jnp.zeros((_SUBLANES, _LANES), jnp.float32)

        if n_full > 0:
            def body(j, carry):
                a_i, a_d, a_t, a_l = carry
                start = pl.multiple_of(j * _SUBLANES, _SUBLANES)
                x = logits_ref[0, :, pl.ds(start, _SUBLANES), :].astype(jnp.float32)
                t = target_ref[0, 0, pl.ds(start, _SUBLANES), :]
                c_i, c_d, c_t, c_l = chunk_stats(x, t, class_iota)
                return a_i + c_i, a_d + c_d, a_t + c_t, a_l + c_l

            acc_i, acc_d, acc_t, acc_l = lax.fori_loop(
                0, n_full, body, (acc_i, acc_d, acc_t, acc_l),
                unroll=min(2, n_full))

        if rem:  # tail sublanes (only when the tile is the full, small extent)
            start = n_full * _SUBLANES
            x = logits_ref[0, :, start:start + rem, :].astype(jnp.float32)
            t = target_ref[0, 0, start:start + rem, :]
            c_i, c_d, c_t, c_l = chunk_stats(x, t, class_iota[:, :rem, :])
            pad3 = ((0, 0), (0, _SUBLANES - rem), (0, 0))
            pad2 = ((0, _SUBLANES - rem), (0, 0))
            acc_i = acc_i + jnp.pad(c_i, pad3)
            acc_d = acc_d + jnp.pad(c_d, pad3)
            acc_t = acc_t + jnp.pad(c_t, pad3)
            acc_l = acc_l + jnp.pad(c_l, pad2)

        out_ref[0, 0:C] += acc_i
        out_ref[0, C:2 * C] += acc_d
        out_ref[0, 2 * C:3 * C] += acc_t
        out_ref[0, 3 * C] += acc_l
    else:
        # Many classes: three (C,8,128) register accumulators would spill, so
        # accumulate each 1024-pixel chunk straight into the resident VMEM
        # output block (bounds vreg pressure at the cost of a few ld/st).
        if n_full > 0:
            @pl.loop(0, n_full)
            def _(j):
                start = pl.multiple_of(j * _SUBLANES, _SUBLANES)
                x = logits_ref[0, :, pl.ds(start, _SUBLANES), :].astype(jnp.float32)
                t = target_ref[0, 0, pl.ds(start, _SUBLANES), :]
                c_i, c_d, c_t, c_l = chunk_stats(x, t, class_iota)
                out_ref[0, 0:C] += c_i
                out_ref[0, C:2 * C] += c_d
                out_ref[0, 2 * C:3 * C] += c_t
                out_ref[0, 3 * C] += c_l

        if rem:
            start = n_full * _SUBLANES
            x = logits_ref[0, :, start:start + rem, :].astype(jnp.float32)
            t = target_ref[0, 0, start:start + rem, :]
            c_i, c_d, c_t, c_l = chunk_stats(x, t, class_iota[:, :rem, :])
            pad3 = ((0, 0), (0, _SUBLANES - rem), (0, 0))
            pad2 = ((0, _SUBLANES - rem), (0, 0))
            out_ref[0, 0:C] += jnp.pad(c_i, pad3)
            out_ref[0, C:2 * C] += jnp.pad(c_d, pad3)
            out_ref[0, 2 * C:3 * C] += jnp.pad(c_t, pad3)
            out_ref[0, 3 * C] += jnp.pad(c_l, pad2)


def _pick_geometry(hw, tile_p):
    """Choose padded pixel extent and tile size.

    Returns (q, s_sub, num_tiles, pad): the padded pixel axis has q*128 pixels,
    each grid step covers s_sub*128 pixels, s_sub divides q, pad = q*128 - hw.
    """
    max_s = max(_SUBLANES, (tile_p // _LANES) // _SUBLANES * _SUBLANES)
    q0 = pl.cdiv(hw, _LANES)
    if q0 <= max_s:
        # Single tile: block equals the full (padded) pixel extent, so no
        # 8-sublane divisibility requirement.
        return q0, q0, 1, q0 * _LANES - hw
    # Multi-tile: pad to a multiple of 1024 so every tile is 8-sublane aligned,
    # then take the largest multiple-of-8 divisor of q that fits tile_p.
    q = pl.cdiv(hw, _CHUNK) * _SUBLANES
    s_sub = _SUBLANES
    for s in range(max_s, _SUBLANES - 1, -_SUBLANES):
        if q % s == 0:
            s_sub = s
            break
    return q, s_sub, q // s_sub, q * _LANES - hw


def combined_loss(logits_nchw, target_nhw, weight, *, tile_p=16384, approx_recip=False):
    """weight[0]*CrossEntropy(logits, target) + weight[1]*Dice(softmax(logits), target)."""
    N, C, H, W = logits_nchw.shape
    HW = H * W
    P = N * HW

    q, s_sub, num_tiles, pad = _pick_geometry(HW, tile_p)

    # Free, contiguous reshapes; dtype preserved (feed bf16 logits upstream for
    # ~2x less HBM read traffic -- the kernel upcasts to f32 internally).
    logits_r = logits_nchw.reshape(N, C, HW)
    target_r = target_nhw.reshape(N, 1, HW).astype(jnp.int32)
    if pad:
        # Zero-pad the pixel axis; the padded pixels' exactly-known contribution
        # (uniform softmax + class-0 one-hot + logsumexp=log C) is subtracted
        # analytically below -- no per-pixel masking inside the kernel.
        logits_r = jnp.pad(logits_r, ((0, 0), (0, 0), (0, pad)))
        target_r = jnp.pad(target_r, ((0, 0), (0, 0), (0, pad)))
    logits_4d = logits_r.reshape(N, C, q, _LANES)
    target_4d = target_r.reshape(N, 1, q, _LANES)

    # v7x megacore balance: if the batch axis alone cannot feed two TensorCores,
    # split the pixel tiles into two parallel superblocks.
    if N >= 2 or num_tiles == 1 or num_tiles % 2 != 0:
        n_super = 1
    else:
        n_super = 2
    tiles_per_super = num_tiles // n_super

    rows = 3 * C + 1
    kern = functools.partial(_combined_loss_kernel, approx_recip=approx_recip)

    parts = pl.pallas_call(
        kern,
        out_shape=jax.ShapeDtypeStruct((N * n_super, rows, _SUBLANES, _LANES),
                                       jnp.float32),
        grid_spec=pltpu.PrefetchScalarGridSpec(
            num_scalar_prefetch=0,
            grid=(N, n_super, tiles_per_super),
            in_specs=[
                pl.BlockSpec((1, C, s_sub, _LANES),
                             lambda n, sb, i: (n, 0, sb * tiles_per_super + i, 0)),
                pl.BlockSpec((1, 1, s_sub, _LANES),
                             lambda n, sb, i: (n, 0, sb * tiles_per_super + i, 0)),
            ],
            out_specs=pl.BlockSpec((1, rows, _SUBLANES, _LANES),
                                   lambda n, sb, i: (n * n_super + sb, 0, 0, 0)),
        ),
        compiler_params=pltpu.CompilerParams(
            dimension_semantics=("parallel", "parallel", "arbitrary"),
            vmem_limit_bytes=32 * 1024 * 1024,
        ),
    )(logits_4d, target_4d)

    # Tiny final reductions + loss combine (negligible vs. the kernel).
    inter = jnp.sum(parts[:, 0:C], axis=(0, 2, 3))          # (C,)
    denom = jnp.sum(parts[:, C:2 * C], axis=(0, 2, 3))      # (C,)
    tx = jnp.sum(parts[:, 2 * C:3 * C])                     # sum_pixels x[target]
    lse_sum = jnp.sum(parts[:, 3 * C])                      # sum_pixels logsumexp

    if pad:
        # Remove the analytically-known contribution of zero-padded pixels:
        # softmax of a zero vector is uniform (1/C), padded target is class 0,
        # logsumexp of a zero vector is log(C), picked logit is 0.
        pad_pix = jnp.float32(N * pad)
        inv_c = jnp.float32(1.0 / C)
        inter = inter.at[0].add(-pad_pix * inv_c)
        denom = denom - pad_pix * inv_c
        denom = denom.at[0].add(-pad_pix)
        lse_sum = lse_sum - pad_pix * jnp.float32(math.log(C))

    ce = (lse_sum - tx) / P
    dice = jnp.mean(1.0 - 2.0 * inter / (denom + EPS))

    w = jnp.asarray(weight, jnp.float32)
    return w[0] * ce + w[1] * dice


def _reference(logits_nchw, target_nhw, weight):
    """Pure-JAX reference mirroring torch CrossEntropyLoss + elektronn3 DiceLoss."""
    N, C, H, W = logits_nchw.shape
    x = jnp.moveaxis(logits_nchw, 1, -1).reshape(-1, C).astype(jnp.float32)
    t = target_nhw.reshape(-1)
    logp = jax.nn.log_softmax(x, axis=-1)
    ce = -jnp.mean(jnp.take_along_axis(logp, t[:, None], axis=-1))
    probs = jax.nn.softmax(x, axis=-1)
    onehot = jax.nn.one_hot(t, C, dtype=jnp.float32)
    inter = jnp.sum(probs * onehot, axis=0)
    denom = jnp.sum(probs + onehot, axis=0) + EPS
    dice = jnp.mean(1.0 - 2.0 * inter / denom)
    return weight[0] * ce + weight[1] * dice


def _check(logits, target, weight, tol, **kw):
    loss = jax.block_until_ready(combined_loss(logits, target, weight, **kw))
    ref = _reference(logits, target, weight)
    assert jnp.allclose(loss, ref, rtol=tol, atol=tol), (loss, ref)


if __name__ == "__main__":
    key = jax.random.PRNGKey(0)
    weight = jnp.array([0.4, 0.6], dtype=jnp.float32)  # CombinedLoss weight buffer

    # 1) Canonical small case (single tile, sublane-tail path).
    k1, k2 = jax.random.split(jax.random.PRNGKey(0))
    logits = jax.random.normal(k1, (2, 4, 16, 16), dtype=jnp.float32)
    target = jax.random.randint(k2, (2, 16, 16), 0, 4, dtype=jnp.int32)
    _check(logits, target, weight, 1e-5)

    # 2) Single tile, exercises the fori_loop chunk path + tail.
    k1, k2 = jax.random.split(jax.random.PRNGKey(1))
    logits = jax.random.normal(k1, (2, 4, 48, 48), dtype=jnp.float32)
    target = jax.random.randint(k2, (2, 48, 48), 0, 4, dtype=jnp.int32)
    _check(logits, target, weight, 1e-5)

    # 3) Multi-tile with pixel padding + N=1 superblock split (small tile_p
    #    forces the tiled path at demo sizes).
    k1, k2 = jax.random.split(jax.random.PRNGKey(2))
    logits = jax.random.normal(k1, (1, 3, 40, 36), dtype=jnp.float32)
    target = jax.random.randint(k2, (1, 40, 36), 0, 3, dtype=jnp.int32)
    _check(logits, target, weight, 1e-4, tile_p=1024)

    # 4) Large class count -> VMEM-accumulation branch.
    k1, k2 = jax.random.split(jax.random.PRNGKey(3))
    logits = jax.random.normal(k1, (1, 16, 40, 32), dtype=jnp.float32)
    target = jax.random.randint(k2, (1, 40, 32), 0, 16, dtype=jnp.int32)
    _check(logits, target, weight, 1e-5)

    print("KERNEL_OK")
</pallas_src>

<mosaic_0001>
module attributes {stable_mosaic.version = 11 : i64} {
  func.func @_combined_loss_kernel(%arg0: i32, %arg1: i32, %arg2: i32, %arg3: memref<1x4x2x128xf32, #tpu.memory_space<vmem>>, %arg4: memref<1x1x2x128xi32, #tpu.memory_space<vmem>>, %arg5: memref<1x13x8x128xf32, #tpu.memory_space<vmem>>) attributes {dimension_semantics = [#tpu.dimension_semantics<parallel>, #tpu.dimension_semantics<parallel>, #tpu.dimension_semantics<arbitrary>], iteration_bounds = array<i64: 2, 1, 1>, scalar_prefetch = 0 : i64, scratch_operands = 0 : i64, tpu.core_type = #tpu.core_type<tc>, window_params = [{transform_indices = @transform_0, window_bounds = array<i64: 1, 4, 2, 128>}, {transform_indices = @transform_1, window_bounds = array<i64: 1, 1, 2, 128>}, {transform_indices = @transform_2, window_bounds = array<i64: 1, 13, 8, 128>}]} {
    %c0_i32 = arith.constant 0 : i32
    %0 = arith.cmpi eq, %arg2, %c0_i32 : i32
    %1 = arith.extui %0 : i1 to i32
    %c0_i32_0 = arith.constant 0 : i32
    %2 = arith.cmpi ne, %1, %c0_i32_0 : i32
    scf.if %2 {
      %cst_46 = arith.constant 0.000000e+00 : f32
      %73 = vector.broadcast %cst_46 : f32 to vector<1x13x8x128xf32>
      %c0_47 = arith.constant 0 : index
      %c0_48 = arith.constant 0 : index
      %c0_49 = arith.constant 0 : index
      %c0_50 = arith.constant 0 : index
      %74 = vector.load %arg5[%c0_47, %c0_48, %c0_49, %c0_50] : memref<1x13x8x128xf32, #tpu.memory_space<vmem>>, vector<1x13x8x128xf32>
      tpu.vector_store %arg5[%c0_47, %c0_48, %c0_49, %c0_50], %73 {strides = array<i32>} : memref<1x13x8x128xf32, #tpu.memory_space<vmem>>, vector<1x13x8x128xf32>,
    } else {
    }
    %3 = tpu.iota {dimensions = array<i32: 0>} : vector<4x8x128xi32>
    %cst = arith.constant 0.000000e+00 : f32
    %4 = vector.broadcast %cst : f32 to vector<4x8x128xf32>
    %cst_1 = arith.constant 0.000000e+00 : f32
    %5 = vector.broadcast %cst_1 : f32 to vector<4x8x128xf32>
    %cst_2 = arith.constant 0.000000e+00 : f32
    %6 = vector.broadcast %cst_2 : f32 to vector<4x8x128xf32>
    %cst_3 = arith.constant 0.000000e+00 : f32
    %7 = vector.broadcast %cst_3 : f32 to vector<8x128xf32>
    %c0 = arith.constant 0 : index
    %c0_4 = arith.constant 0 : index
    %c0_5 = arith.constant 0 : index
    %c0_6 = arith.constant 0 : index
    %8 = vector.load %arg3[%c0, %c0_4, %c0_5, %c0_6] : memref<1x4x2x128xf32, #tpu.memory_space<vmem>>, vector<1x4x2x128xf32>
    %9 = vector.shape_cast %8 : vector<1x4x2x128xf32> to vector<4x2x128xf32>
    %c0_7 = arith.constant 0 : index
    %c0_8 = arith.constant 0 : index
    %c0_9 = arith.constant 0 : index
    %c0_10 = arith.constant 0 : index
    %10 = vector.load %arg4[%c0_7, %c0_8, %c0_9, %c0_10] : memref<1x1x2x128xi32, #tpu.memory_space<vmem>>, vector<1x1x2x128xi32>
    %11 = vector.shape_cast %10 : vector<1x1x2x128xi32> to vector<2x128xi32>
    %12 = vector.extract_strided_slice %3 {offsets = [0, 0, 0], sizes = [4, 2, 128], strides = [1, 1, 1]} : vector<4x8x128xi32> to vector<4x2x128xi32>
    %13 = vector.shape_cast %11 : vector<2x128xi32> to vector<1x2x128xi32>
    %14 = vector.broadcast %13 : vector<1x2x128xi32> to vector<4x2x128xi32>
    %15 = arith.cmpi eq, %12, %14 : vector<4x2x128xi32>
    %16 = arith.extui %15 : vector<4x2x128xi1> to vector<4x2x128xi32>
    %17 = arith.sitofp %16 : vector<4x2x128xi32> to vector<4x2x128xf32>
    %cst_11 = arith.constant dense<0xFF800000> : vector<2x128xf32>
    %18 = vector.multi_reduction <maximumf>, %9, %cst_11 [0] : vector<4x2x128xf32> to vector<2x128xf32>
    %19 = vector.shape_cast %18 : vector<2x128xf32> to vector<1x2x128xf32>
    %20 = vector.broadcast %19 : vector<1x2x128xf32> to vector<4x2x128xf32>
    %21 = arith.subf %9, %20 : vector<4x2x128xf32>
    %22 = math.exp %21 : vector<4x2x128xf32>
    %cst_12 = arith.constant dense<0.000000e+00> : vector<2x128xf32>
    %23 = vector.multi_reduction <add>, %22, %cst_12 [0] : vector<4x2x128xf32> to vector<2x128xf32>
    %24 = tpu.reciprocal %23 : vector<2x128xf32> -> vector<2x128xf32>
    %25 = vector.shape_cast %24 : vector<2x128xf32> to vector<1x2x128xf32>
    %26 = vector.broadcast %25 : vector<1x2x128xf32> to vector<4x2x128xf32>
    %27 = arith.mulf %22, %26 : vector<4x2x128xf32>
    %28 = math.log %23 : vector<2x128xf32>
    %29 = arith.addf %18, %28 : vector<2x128xf32>
    %30 = arith.mulf %27, %17 : vector<4x2x128xf32>
    %31 = arith.addf %27, %17 : vector<4x2x128xf32>
    %32 = arith.mulf %17, %9 : vector<4x2x128xf32>
    %c0_i32_13 = arith.constant 0 : i32
    %33 = arith.sitofp %c0_i32_13 : i32 to f32
    %34 = vector.broadcast %33 : f32 to vector<4x6x128xf32>
    %35 = tpu.concatenate %30, %34 in 1 : vector<4x2x128xf32>, vector<4x6x128xf32> -> vector<4x8x128xf32>
    %36 = arith.addf %4, %35 : vector<4x8x128xf32>
    %c0_i32_14 = arith.constant 0 : i32
    %37 = arith.sitofp %c0_i32_14 : i32 to f32
    %38 = vector.broadcast %37 : f32 to vector<4x6x128xf32>
    %39 = tpu.concatenate %31, %38 in 1 : vector<4x2x128xf32>, vector<4x6x128xf32> -> vector<4x8x128xf32>
    %40 = arith.addf %5, %39 : vector<4x8x128xf32>
    %c0_i32_15 = arith.constant 0 : i32
    %41 = arith.sitofp %c0_i32_15 : i32 to f32
    %42 = vector.broadcast %41 : f32 to vector<4x6x128xf32>
    %43 = tpu.concatenate %32, %42 in 1 : vector<4x2x128xf32>, vector<4x6x128xf32> -> vector<4x8x128xf32>
    %44 = arith.addf %6, %43 : vector<4x8x128xf32>
    %c0_i32_16 = arith.constant 0 : i32
    %45 = arith.sitofp %c0_i32_16 : i32 to f32
    %46 = vector.broadcast %45 : f32 to vector<6x128xf32>
    %47 = tpu.concatenate %29, %46 in 0 : vector<2x128xf32>, vector<6x128xf32> -> vector<8x128xf32>
    %48 = arith.addf %7, %47 : vector<8x128xf32>
    %c0_17 = arith.constant 0 : index
    %c0_18 = arith.constant 0 : index
    %c0_19 = arith.constant 0 : index
    %c0_20 = arith.constant 0 : index
    %49 = vector.load %arg5[%c0_17, %c0_18, %c0_19, %c0_20] : memref<1x13x8x128xf32, #tpu.memory_space<vmem>>, vector<1x4x8x128xf32>
    %50 = vector.shape_cast %49 : vector<1x4x8x128xf32> to vector<4x8x128xf32>
    %51 = arith.addf %50, %36 : vector<4x8x128xf32>
    %c0_21 = arith.constant 0 : index
    %c0_22 = arith.constant 0 : index
    %c0_23 = arith.constant 0 : index
    %c0_24 = arith.constant 0 : index
    %52 = vector.load %arg5[%c0_21, %c0_22, %c0_23, %c0_24] : memref<1x13x8x128xf32, #tpu.memory_space<vmem>>, vector<1x4x8x128xf32>
    %53 = vector.shape_cast %52 : vector<1x4x8x128xf32> to vector<4x8x128xf32>
    %54 = vector.shape_cast %51 : vector<4x8x128xf32> to vector<1x4x8x128xf32>
    tpu.vector_store %arg5[%c0_21, %c0_22, %c0_23, %c0_24], %54 {strides = array<i32>} : memref<1x13x8x128xf32, #tpu.memory_space<vmem>>, vector<1x4x8x128xf32>,
    %c0_25 = arith.constant 0 : index
    %c4 = arith.constant 4 : index
    %c0_26 = arith.constant 0 : index
    %c0_27 = arith.constant 0 : index
    %55 = vector.load %arg5[%c0_25, %c4, %c0_26, %c0_27] : memref<1x13x8x128xf32, #tpu.memory_space<vmem>>, vector<1x4x8x128xf32>
    %56 = vector.shape_cast %55 : vector<1x4x8x128xf32> to vector<4x8x128xf32>
    %57 = arith.addf %56, %40 : vector<4x8x128xf32>
    %c0_28 = arith.constant 0 : index
    %c4_29 = arith.constant 4 : index
    %c0_30 = arith.constant 0 : index
    %c0_31 = arith.constant 0 : index
    %58 = vector.load %arg5[%c0_28, %c4_29, %c0_30, %c0_31] : memref<1x13x8x128xf32, #tpu.memory_space<vmem>>, vector<1x4x8x128xf32>
    %59 = vector.shape_cast %58 : vector<1x4x8x128xf32> to vector<4x8x128xf32>
    %60 = vector.shape_cast %57 : vector<4x8x128xf32> to vector<1x4x8x128xf32>
    tpu.vector_store %arg5[%c0_28, %c4_29, %c0_30, %c0_31], %60 {strides = array<i32>} : memref<1x13x8x128xf32, #tpu.memory_space<vmem>>, vector<1x4x8x128xf32>,
    %c0_32 = arith.constant 0 : index
    %c8 = arith.constant 8 : index
    %c0_33 = arith.constant 0 : index
    %c0_34 = arith.constant 0 : index
    %61 = vector.load %arg5[%c0_32, %c8, %c0_33, %c0_34] : memref<1x13x8x128xf32, #tpu.memory_space<vmem>>, vector<1x4x8x128xf32>
    %62 = vector.shape_cast %61 : vector<1x4x8x128xf32> to vector<4x8x128xf32>
    %63 = arith.addf %62, %44 : vector<4x8x128xf32>
    %c0_35 = arith.constant 0 : index
    %c8_36 = arith.constant 8 : index
    %c0_37 = arith.constant 0 : index
    %c0_38 = arith.constant 0 : index
    %64 = vector.load %arg5[%c0_35, %c8_36, %c0_37, %c0_38] : memref<1x13x8x128xf32, #tpu.memory_space<vmem>>, vector<1x4x8x128xf32>
    %65 = vector.shape_cast %64 : vector<1x4x8x128xf32> to vector<4x8x128xf32>
    %66 = vector.shape_cast %63 : vector<4x8x128xf32> to vector<1x4x8x128xf32>
    tpu.vector_store %arg5[%c0_35, %c8_36, %c0_37, %c0_38], %66 {strides = array<i32>} : memref<1x13x8x128xf32, #tpu.memory_space<vmem>>, vector<1x4x8x128xf32>,
    %c0_39 = arith.constant 0 : index
    %c12 = arith.constant 12 : index
    %c0_40 = arith.constant 0 : index
    %c0_41 = arith.constant 0 : index
    %67 = vector.load %arg5[%c0_39, %c12, %c0_40, %c0_41] : memref<1x13x8x128xf32, #tpu.memory_space<vmem>>, vector<1x1x8x128xf32>
    %68 = vector.shape_cast %67 : vector<1x1x8x128xf32> to vector<8x128xf32>
    %69 = arith.addf %68, %48 : vector<8x128xf32>
    %c0_42 = arith.constant 0 : index
    %c12_43 = arith.constant 12 : index
    %c0_44 = arith.constant 0 : index
    %c0_45 = arith.constant 0 : index
    %70 = vector.load %arg5[%c0_42, %c12_43, %c0_44, %c0_45] : memref<1x13x8x128xf32, #tpu.memory_space<vmem>>, vector<1x1x8x128xf32>
    %71 = vector.shape_cast %70 : vector<1x1x8x128xf32> to vector<8x128xf32>
    %72 = vector.shape_cast %69 : vector<8x128xf32> to vector<1x1x8x128xf32>
    tpu.vector_store %arg5[%c0_42, %c12_43, %c0_44, %c0_45], %72 {strides = array<i32>} : memref<1x13x8x128xf32, #tpu.memory_space<vmem>>, vector<1x1x8x128xf32>,
    return
  }
  func.func @transform_0(%arg0: i32, %arg1: i32, %arg2: i32) -> (i32, i32, i32, i32) {
    %c1_i32 = arith.constant 1 : i32
    %0 = arith.muli %arg1, %c1_i32 : i32
    %1 = arith.addi %0, %arg2 : i32
    %c0_i32 = arith.constant 0 : i32
    %c0_i32_0 = arith.constant 0 : i32
    %c0_i32_1 = arith.constant 0 : i32
    return %arg0, %c0_i32, %1, %c0_i32_0 : i32, i32, i32, i32
  }
  func.func @transform_1(%arg0: i32, %arg1: i32, %arg2: i32) -> (i32, i32, i32, i32) {
    %c1_i32 = arith.constant 1 : i32
    %0 = arith.muli %arg1, %c1_i32 : i32
    %1 = arith.addi %0, %arg2 : i32
    %c0_i32 = arith.constant 0 : i32
    %c0_i32_0 = arith.constant 0 : i32
    %c0_i32_1 = arith.constant 0 : i32
    return %arg0, %c0_i32, %1, %c0_i32_0 : i32, i32, i32, i32
  }
  func.func @transform_2(%arg0: i32, %arg1: i32, %arg2: i32) -> (i32, i32, i32, i32) {
    %c1_i32 = arith.constant 1 : i32
    %0 = arith.muli %arg0, %c1_i32 : i32
    %1 = arith.addi %0, %arg1 : i32
    %c0_i32 = arith.constant 0 : i32
    %c0_i32_0 = arith.constant 0 : i32
    %c0_i32_1 = arith.constant 0 : i32
    %c0_i32_2 = arith.constant 0 : i32
    return %1, %c0_i32, %c0_i32_0, %c0_i32_1 : i32, i32, i32, i32
  }
}

</mosaic_0001>

<llo_original>
// kernel: tpu_custom_call.1
$region0: #{tpu_custom_call.1}
  #allocation0 [shape = 'u32[]', space=smem, size = 0x4, offset = 0x4, fixed_abs, tag = 'smem constant byte address 0x4 - core index']
  #allocation1 [shape = 'u32[144,128]{1,0:T(1,128)}', space=vmem, size = 0x12000, scoped, tag = 'internal scratch']
  %s0 = inlined_call_operand.hbm [shape: f32[2,4,2,128], index: 0, kind: input, shape index: {}]
  %s1 = inlined_call_operand.hbm [shape: s32[2,1,2,128], index: 1, kind: input, shape index: {}]
  %s2 = inlined_call_operand.hbm [shape: f32[2,13,8,128], index: 2, kind: output, shape index: {}]
  %s3 = sld [smem:[#allocation0]]
  $region53: #{tpu_custom_call.1} parent=0
    _
  %s5 = ssub.s32 1, %s3
  %s6 = scalar_select 0, %s5, %s3
  $region1: #{tpu_custom_call.1} parent=0
    #allocation2 [shape = 'u8[8192]{0}', space=vmem, size = 0x2000, scoped, tag = 'input window, operand 0']
    #allocation3 [shape = 's32[2]{0}', space=sflag, size = 0x8, scoped, tag = 'scoped memory for tpu_custom_call.1']
    #allocation4 [shape = 's32[2]{0}', space=sflag, size = 0x8, scoped, tag = 'scoped memory for tpu_custom_call.1']
    #allocation5 [shape = 'u8[2048]{0}', space=vmem, size = 0x800, scoped, tag = 'input window, operand 1']
    #allocation6 [shape = 's32[2]{0}', space=sflag, size = 0x8, scoped, tag = 'scoped memory for tpu_custom_call.1']
    #allocation7 [shape = 'u8[106496]{0}', space=vmem, size = 0x1a000, scoped, tag = 'output window, operand 0']
    %7 = vsyncpa [#allocation3], 0
    %s8 = scalar_lea.sflag [#allocation3], 1
    %9 = vsyncpa %s8, 0
    %10 = vsyncpa [#allocation6], 0
    %s11 = scalar_lea.sflag [#allocation6], 1
    %12 = vsyncpa %s11, 0
    %13 = vsyncpa [#allocation4], 0
    %s14 = scalar_lea.sflag [#allocation4], 1
    %15 = vsyncpa %s14, 0
    loop: start=0, step=1, limit=4
    $region2: #{tpu_custom_call.1} parent=1 // loop_pre_header
      _
    $region3: #{tpu_custom_call.1} parent=1 // loop_header
      %s17 = sphi 0, %s21
      %p18 = scmp.ge.s32.totalorder %s17, 4
      %s24 = sphi 0, %s43
      %s25 = sphi 0, %s39
      %s26 = sphi 0, %s35
      %s27 = sphi 0, %s24
      %s28 = sphi 0, %s25
      %s29 = sphi 0, %s26
      %s30 = sphi 0, %s27
      %s31 = sphi 0, %s28
      %s32 = sphi 0, %s29
      %s50 = sphi 0, %s52
      %s53 = sphi 0, %s50
      %s54 = sphi 0, %s53
      %s70 = sphi 0, %s54
      %s80 = sphi 0, %s82
      %s83 = sphi 0, %s80
      %s84 = sphi 0, %s83
      %s100 = sphi 0, %s84
      %s108 = sphi 0, %s110
      %s111 = sphi 0, %s108
      %s112 = sphi 0, %s111
      %s128 = sphi 0, %s112
    $region4: #{tpu_custom_call.1} parent=1 // loop_header_branch
      %20 = sbr.rel (%p18) target = $region8
    $region5: #{tpu_custom_call.1} parent=1 // loop_body
      %s22 = ssub.s32 %s17, 1
      %s23 = ssub.s32 %s17, 2
      %s33 = sadd.s32 1, %s26
      %p34 = scmp.ge.s32.totalorder %s33, 1
      %s35 = scalar_select %p34, 0, %s33
      %s36 = sadd.s32 1, %s25
      %s37 = scalar_select %p34, %s36, %s25
      %p38 = scmp.ge.s32.totalorder %s37, 1
      %s39 = scalar_select %p38, 0, %s37
      %s40 = sadd.s32 1, %s24
      %s41 = scalar_select %p38, %s40, %s24
      %p42 = scmp.ge.s32.totalorder %s41, 2
      %s43 = scalar_select %p42, 0, %s41
      %s44 = sadd.s32 %s25, %s26
      %s45 = sadd.s32 %s39, %s35
      %s46 = ssub.s32 %s24, %s43
      %s47 = ssub.s32 %s44, %s45
      %s48 = sor.u32 %s46, %s47
      %p49 = scmp.eq.s32.totalorder %s48, 0
      %s51 = sadd.s32 %s50, 1
      %s52 = scalar_select %p49, %s50, %s51
      %p55 = pneg %p49
      %p56 = scmp.eq.s32.totalorder %s17, 1
      %p57 = por %p55, %p56
      %p58 = scmp.ne.s32.totalorder %s50, %s53
      %p59 = scmp.eq.s32.totalorder %s17, 0
      %p60 = por %p58, %p59
      %p61 = scmp.ne.s32.totalorder %s50, %s53
      %p62 = scmp.eq.s32.totalorder %s22, 1
      %p63 = por %p61, %p62
      %p64 = scmp.ne.s32.totalorder %s53, %s54
      %p65 = scmp.eq.s32.totalorder %s22, 0
      %p66 = por %p64, %p65
      %p67 = scmp.ne.s32.totalorder %s53, %s54
      %p68 = scmp.eq.s32.totalorder %s23, 1
      %p69 = por %p67, %p68
      %p71 = scmp.ne.s32.totalorder %s54, %s70
      %p72 = scmp.eq.s32.totalorder %s23, 0
      %p73 = por %p71, %p72
      %s74 = sadd.s32 %s25, %s26
      %s75 = sadd.s32 %s39, %s35
      %s76 = ssub.s32 %s24, %s43
      %s77 = ssub.s32 %s74, %s75
      %s78 = sor.u32 %s76, %s77
      %p79 = scmp.eq.s32.totalorder %s78, 0
      %s81 = sadd.s32 %s80, 1
      %s82 = scalar_select %p79, %s80, %s81
      %p85 = pneg %p79
      %p86 = scmp.eq.s32.totalorder %s17, 1
      %p87 = por %p85, %p86
      %p88 = scmp.ne.s32.totalorder %s80, %s83
      %p89 = scmp.eq.s32.totalorder %s17, 0
      %p90 = por %p88, %p89
      %p91 = scmp.ne.s32.totalorder %s80, %s83
      %p92 = scmp.eq.s32.totalorder %s22, 1
      %p93 = por %p91, %p92
      %p94 = scmp.ne.s32.totalorder %s83, %s84
      %p95 = scmp.eq.s32.totalorder %s22, 0
      %p96 = por %p94, %p95
      %p97 = scmp.ne.s32.totalorder %s83, %s84
      %p98 = scmp.eq.s32.totalorder %s23, 1
      %p99 = por %p97, %p98
      %p101 = scmp.ne.s32.totalorder %s84, %s100
      %p102 = scmp.eq.s32.totalorder %s23, 0
      %p103 = por %p101, %p102
      %s104 = sadd.s32 %s24, %s25
      %s105 = sadd.s32 %s43, %s39
      %s106 = ssub.s32 %s104, %s105
      %p107 = scmp.eq.s32.totalorder %s106, 0
      %s109 = sadd.s32 %s108, 1
      %s110 = scalar_select %p107, %s108, %s109
      %p113 = pneg %p107
      %p114 = scmp.eq.s32.totalorder %s17, 1
      %p115 = por %p113, %p114
      %p116 = scmp.ne.s32.totalorder %s108, %s111
      %p117 = scmp.eq.s32.totalorder %s17, 0
      %p118 = por %p116, %p117
      %p119 = scmp.ne.s32.totalorder %s108, %s111
      %p120 = scmp.eq.s32.totalorder %s22, 1
      %p121 = por %p119, %p120
      %p122 = scmp.ne.s32.totalorder %s111, %s112
      %p123 = scmp.eq.s32.totalorder %s22, 0
      %p124 = por %p122, %p123
      %p125 = scmp.ne.s32.totalorder %s111, %s112
      %p126 = scmp.eq.s32.totalorder %s23, 1
      %p127 = por %p125, %p126
      %p129 = scmp.ne.s32.totalorder %s112, %s128
      %p130 = scmp.eq.s32.totalorder %s23, 0
      %p131 = por %p129, %p130
      %p132 = scmp.le.s32.totalorder 1, %s17
      %p133 = scmp.lt.s32.totalorder %s17, 3
      %p134 = pnand %p132, %p133
      %p135 = pneg %p134
      // Predicated region
      $region9: #{tpu_custom_call.1} parent=5 // pred_check
        _
      $region10: #{tpu_custom_call.1} parent=5 // pred_check_branch
        %137 = sbr.rel (%p134) target = $region12
      $region11: #{tpu_custom_call.1} parent=5 // pred_region
        %s138 = ssub.s32 %s17, 1
      $region12: #{tpu_custom_call.1} parent=5 // pred_fallthru
        _
      %p139 = scmp.lt.s32.totalorder %s17, 2
      // Predicated region
      $region13: #{tpu_custom_call.1} parent=5 // pred_check
        %p140 = pneg %p139
      $region14: #{tpu_custom_call.1} parent=5 // pred_check_branch
        %142 = sbr.rel (%p140) target = $region16
      $region15: #{tpu_custom_call.1} parent=5 // pred_region
        // Predicated region
        $region17: #{tpu_custom_call.1} parent=15 // pred_check
          %p143 = pneg %p60
        $region18: #{tpu_custom_call.1} parent=15 // pred_check_branch
          %145 = sbr.rel (%p143) target = $region20
        $region19: #{tpu_custom_call.1} parent=15 // pred_region
          %s146 = sand.u32 %s50, 1
          %s147 = scalar_lea.sflag [#allocation3], %s146
          %s148 = sand.u32 %s50, 1
          %s149 = smul.addr %s148, 8
          %s150 = scalar_lea.vmem [#allocation2], %s149
          %s151 = sadd.s32 %s25, %s26
          %s153 = ssub.s32 128, 128
          %154 = vsyncadd %s147, %s153
          %s155 = smul.addr %s24, 4
          %s156 = sadd.s32 %s151, %s155
          %s157 = smul.addr %s156, 32
          %s158 = scalar_lea.hbm %s0, %s157
          %s159 = sshll.u32 %s150, 4
          %s160 = int_to_ptr.vmem [resolvable:$true] %s159
          %165 = dma.hbm_to_vmem [thread:$0]  %s158, 128, %s160, %s147, 32, 32, 2
        $region20: #{tpu_custom_call.1} parent=15 // pred_fallthru
          _
        // Predicated region
        $region21: #{tpu_custom_call.1} parent=15 // pred_check
          %p166 = pneg %p90
        $region22: #{tpu_custom_call.1} parent=15 // pred_check_branch
          %168 = sbr.rel (%p166) target = $region24
        $region23: #{tpu_custom_call.1} parent=15 // pred_region
          %s169 = sand.u32 %s80, 1
          %s170 = scalar_lea.sflag [#allocation6], %s169
          %s171 = sand.u32 %s80, 1
          %s172 = smul.addr %s171, 2
          %s173 = scalar_lea.vmem [#allocation5], %s172
          %s174 = sadd.s32 %s25, %s26
          %s176 = ssub.s32 32, 32
          %177 = vsyncadd %s170, %s176
          %s178 = sadd.s32 %s174, %s24
          %s179 = smul.addr %s178, 32
          %s180 = scalar_lea.hbm %s1, %s179
          %s182 = sshll.u32 %s173, 4
          %s183 = int_to_ptr.vmem [resolvable:$true] %s182
          %185 = dma.hbm_to_vmem [thread:$0]  %s180, 32, %s183, %s170
        $region24: #{tpu_custom_call.1} parent=15 // pred_fallthru
          _
      $region16: #{tpu_custom_call.1} parent=5 // pred_fallthru
        _
      %p186 = scmp.le.s32.totalorder 1, %s17
      %p187 = scmp.lt.s32.totalorder %s17, 3
      %p188 = pnand %p186, %p187
      %p189 = pneg %p188
      // Predicated region
      $region25: #{tpu_custom_call.1} parent=5 // pred_check
        _
      $region26: #{tpu_custom_call.1} parent=5 // pred_check_branch
        %191 = sbr.rel (%p188) target = $region28
      $region27: #{tpu_custom_call.1} parent=5 // pred_region
        %s192 = ssub.s32 %s17, 1
        %s193 = sand.u32 %s53, 1
        %s194 = scalar_lea.sflag [#allocation3], %s193
        %s195 = sand.u32 %s53, 1
        %s196 = smul.addr %s195, 8
        %s197 = scalar_lea.vmem [#allocation2], %s196
        // Predicated region
        $region29: #{tpu_custom_call.1} parent=27 // pred_check
          %p198 = pneg %p66
        $region30: #{tpu_custom_call.1} parent=27 // pred_check_branch
          %200 = sbr.rel (%p198) target = $region32
        $region31: #{tpu_custom_call.1} parent=27 // pred_region
          %201 = dma.done %s194, 128
        $region32: #{tpu_custom_call.1} parent=27 // pred_fallthru
          _
        %s202 = sand.u32 %s83, 1
        %s203 = scalar_lea.sflag [#allocation6], %s202
        %s204 = sand.u32 %s83, 1
        %s205 = smul.addr %s204, 2
        %s206 = scalar_lea.vmem [#allocation5], %s205
        // Predicated region
        $region33: #{tpu_custom_call.1} parent=27 // pred_check
          %p207 = pneg %p96
        $region34: #{tpu_custom_call.1} parent=27 // pred_check_branch
          %209 = sbr.rel (%p207) target = $region36
        $region35: #{tpu_custom_call.1} parent=27 // pred_region
          %210 = dma.done %s203, 32
        $region36: #{tpu_custom_call.1} parent=27 // pred_fallthru
          _
        %s211 = sand.u32 %s53, 1
        %s212 = scalar_lea.sflag [#allocation3], %s211
        %s213 = sand.u32 %s53, 1
        %s214 = smul.addr %s213, 8
        %s215 = scalar_lea.vmem [#allocation2], %s214
        %p216 = pneg %p66
        %p217 = pneg %p63
        %s218 = sand.u32 %s83, 1
        %s219 = scalar_lea.sflag [#allocation6], %s218
        %s220 = sand.u32 %s83, 1
        %s221 = smul.addr %s220, 2
        %s222 = scalar_lea.vmem [#allocation5], %s221
        %p223 = pneg %p96
        %p224 = pneg %p93
        %p225 = pneg %p124
        %p226 = pneg %p121
        %s227 = sand.u32 %s111, 1
        %s228 = scalar_lea.sflag [#allocation4], %s227
        %s229 = sand.u32 %s111, 1
        %s230 = smul.addr %s229, 104
        %s231 = scalar_lea.vmem [#allocation7], %s230
        %s232 = sadd.s32 %s28, %s29
        %s233 = sadd.s32 %s28, %s29
        %s234 = sadd.s32 %s27, %s28
        %p235 = scmp.eq.s32.totalorder %s29, 0
        // Predicated region
        $region37: #{tpu_custom_call.1} parent=27 // pred_check
          %p236 = pneg %p235
        $region38: #{tpu_custom_call.1} parent=27 // pred_check_branch
          %238 = sbr.rel (%p236) target = $region40
        $region39: #{tpu_custom_call.1} parent=27 // pred_region
          %239 = vst [vmem:[%s231] sm:$0xff] 0.0
          %240 = vst [vmem:[%s231 + $0x8] sm:$0xff] 0.0
          %241 = vst [vmem:[%s231 + $0x10] sm:$0xff] 0.0
          %242 = vst [vmem:[%s231 + $0x18] sm:$0xff] 0.0
          %243 = vst [vmem:[%s231 + $0x20] sm:$0xff] 0.0
          %244 = vst [vmem:[%s231 + $0x28] sm:$0xff] 0.0
          %245 = vst [vmem:[%s231 + $0x30] sm:$0xff] 0.0
          %246 = vst [vmem:[%s231 + $0x38] sm:$0xff] 0.0
          %247 = vst [vmem:[%s231 + $0x40] sm:$0xff] 0.0
          %248 = vst [vmem:[%s231 + $0x48] sm:$0xff] 0.0
          %249 = vst [vmem:[%s231 + $0x50] sm:$0xff] 0.0
          %250 = vst [vmem:[%s231 + $0x58] sm:$0xff] 0.0
          %251 = vst [vmem:[%s231 + $0x60] sm:$0xff] 0.0
        $region40: #{tpu_custom_call.1} parent=27 // pred_fallthru
          _
        %v252 = vld [vmem:[%s197] sm:$0x3]
        %v253 = vld [vmem:[%s197 + $0x2] sm:$0x3]
        %v254 = vld [vmem:[%s197 + $0x4] sm:$0x3]
        %v255 = vld [vmem:[%s197 + $0x6] sm:$0x3]
        %v256 = vld [vmem:[%s206] sm:$0x3]
        %vm257 = vcmp.eq.s32.totalorder %v256, 0
        %vm258 = vcmp.eq.s32.totalorder %v256, 1
        %vm259 = vcmp.eq.s32.totalorder %v256, 2
        %vm260 = vcmp.eq.s32.totalorder %v256, 3
        %v261 = vsel %vm257, 1, 0
        %v262 = vsel %vm258, 1, 0
        %v263 = vsel %vm259, 1, 0
        %v264 = vsel %vm260, 1, 0
        %v265 = vcvt.s32.f32 %v261
        %v266 = vcvt.s32.f32 %v262
        %v267 = vcvt.s32.f32 %v263
        %v268 = vcvt.s32.f32 %v264
        %vm269 = vcmask 1041408
        %v270 = vsel %vm269, %v252, -inf
        %v271 = vsel %vm269, %v253, -inf
        %v272 = vsel %vm269, %v254, -inf
        %v273 = vsel %vm269, %v255, -inf
        %v274 = vmax.f32 %v270, %v271
        %v275 = vmax.f32 %v272, %v273
        %v276 = vmax.f32 %v274, %v275
        %v277 = vsub.f32 %v252, %v276
        %v278 = vsub.f32 %v253, %v276
        %v279 = vsub.f32 %v254, %v276
        %v280 = vsub.f32 %v255, %v276
        %v281 = vmul.f32 %v277, 1.442695
        %v282 = vpow.pop %v281
        %v283 = vmul.f32 %v278, 1.442695
        %v284 = vpow.pop %v283
        %v285 = vmul.f32 %v279, 1.442695
        %v286 = vpow.pop %v285
        %v287 = vmul.f32 %v280, 1.442695
        %v288 = vpow.pop %v287
        %v289 = vsel %vm269, %v282, 0.0
        %v290 = vsel %vm269, %v284, 0.0
        %v291 = vadd.f32 %v289, %v290
        %v292 = vsel %vm269, %v286, 0.0
        %v293 = vadd.f32 %v291, %v292
        %v294 = vsel %vm269, %v288, 0.0
        %v295 = vadd.f32 %v293, %v294
        %v296 = vrcp.pop %v295
        %v297 = vmul.f32 %v282, %v296
        %v298 = vmul.f32 %v284, %v296
        %v299 = vmul.f32 %v286, %v296
        %v300 = vmul.f32 %v288, %v296
        %v301 = vlog2.pop %v295
        %v302 = vmul.f32 %v301, 0.6931472
        %v303 = vadd.f32 %v276, %v302
        %v304 = vmul.f32 %v297, %v265
        %v305 = vmul.f32 %v298, %v266
        %v306 = vmul.f32 %v299, %v267
        %v307 = vmul.f32 %v300, %v268
        %v308 = vadd.f32 %v297, %v265
        %v309 = vadd.f32 %v298, %v266
        %v310 = vadd.f32 %v299, %v267
        %v311 = vadd.f32 %v300, %v268
        %v312 = vmul.f32 %v265, %v252
        %v313 = vmul.f32 %v266, %v253
        %v314 = vmul.f32 %v267, %v254
        %v315 = vmul.f32 %v268, %v255
        %v316 = vsel %vm269, %v304, 0.0
        %v317 = vsel %vm269, %v305, 0.0
        %v318 = vsel %vm269, %v306, 0.0
        %v319 = vsel %vm269, %v307, 0.0
        %v320 = vadd.f32 %v316, 0.0
        %v321 = vadd.f32 %v317, 0.0
        %v322 = vadd.f32 %v318, 0.0
        %v323 = vadd.f32 %v319, 0.0
        %v324 = vsel %vm269, %v308, 0.0
        %v325 = vsel %vm269, %v309, 0.0
        %v326 = vsel %vm269, %v310, 0.0
        %v327 = vsel %vm269, %v311, 0.0
        %v328 = vadd.f32 %v324, 0.0
        %v329 = vadd.f32 %v325, 0.0
        %v330 = vadd.f32 %v326, 0.0
        %v331 = vadd.f32 %v327, 0.0
        %v332 = vsel %vm269, %v312, 0.0
        %v333 = vsel %vm269, %v313, 0.0
        %v334 = vsel %vm269, %v314, 0.0
        %v335 = vsel %vm269, %v315, 0.0
        %v336 = vadd.f32 %v332, 0.0
        %v337 = vadd.f32 %v333, 0.0
        %v338 = vadd.f32 %v334, 0.0
        %v339 = vadd.f32 %v335, 0.0
        %v340 = vsel %vm269, %v303, 0.0
        %v341 = vadd.f32 %v340, 0.0
        %v342 = vld [vmem:[%s231] sm:$0xff]
        %v343 = vld [vmem:[%s231 + $0x8] sm:$0xff]
        %v344 = vld [vmem:[%s231 + $0x10] sm:$0xff]
        %v345 = vld [vmem:[%s231 + $0x18] sm:$0xff]
        %v346 = vadd.f32 %v342, %v320
        %v347 = vadd.f32 %v343, %v321
        %v348 = vadd.f32 %v344, %v322
        %v349 = vadd.f32 %v345, %v323
        %350 = vst [vmem:[%s231] sm:$0xff] %v346
        %351 = vst [vmem:[%s231 + $0x8] sm:$0xff] %v347
        %352 = vst [vmem:[%s231 + $0x10] sm:$0xff] %v348
        %353 = vst [vmem:[%s231 + $0x18] sm:$0xff] %v349
        %s354 = scalar_lea.vmem %s231, 32 [#allocation7]
        %v355 = vld [vmem:[%s354] sm:$0xff]
        %v356 = vld [vmem:[%s354 + $0x8] sm:$0xff]
        %v357 = vld [vmem:[%s354 + $0x10] sm:$0xff]
        %v358 = vld [vmem:[%s354 + $0x18] sm:$0xff]
        %v359 = vadd.f32 %v355, %v328
        %v360 = vadd.f32 %v356, %v329
        %v361 = vadd.f32 %v357, %v330
        %v362 = vadd.f32 %v358, %v331
        %363 = vst [vmem:[%s354] sm:$0xff] %v359
        %364 = vst [vmem:[%s354 + $0x8] sm:$0xff] %v360
        %365 = vst [vmem:[%s354 + $0x10] sm:$0xff] %v361
        %366 = vst [vmem:[%s354 + $0x18] sm:$0xff] %v362
        %s367 = scalar_lea.vmem %s231, 64 [#allocation7]
        %v368 = vld [vmem:[%s367] sm:$0xff]
        %v369 = vld [vmem:[%s367 + $0x8] sm:$0xff]
        %v370 = vld [vmem:[%s367 + $0x10] sm:$0xff]
        %v371 = vld [vmem:[%s367 + $0x18] sm:$0xff]
        %v372 = vadd.f32 %v368, %v336
        %v373 = vadd.f32 %v369, %v337
        %v374 = vadd.f32 %v370, %v338
        %v375 = vadd.f32 %v371, %v339
        %376 = vst [vmem:[%s367] sm:$0xff] %v372
        %377 = vst [vmem:[%s367 + $0x8] sm:$0xff] %v373
        %378 = vst [vmem:[%s367 + $0x10] sm:$0xff] %v374
        %379 = vst [vmem:[%s367 + $0x18] sm:$0xff] %v375
        %s380 = scalar_lea.vmem %s231, 96 [#allocation7]
        %v381 = vld [vmem:[%s380] sm:$0xff]
        %v382 = vadd.f32 %v381, %v341
        %383 = vst [vmem:[%s380] sm:$0xff] %v382
        %s384 = sand.u32 %s111, 1
        %s385 = scalar_lea.sflag [#allocation4], %s384
        %s386 = sand.u32 %s111, 1
        %s387 = smul.addr %s386, 104
        %s388 = scalar_lea.vmem [#allocation7], %s387
        // Predicated region
        $region41: #{tpu_custom_call.1} parent=27 // pred_check
          %p389 = pneg %p121
        $region42: #{tpu_custom_call.1} parent=27 // pred_check_branch
          %391 = sbr.rel (%p389) target = $region44
        $region43: #{tpu_custom_call.1} parent=27 // pred_region
          %s392 = sadd.s32 %s27, %s28
          %s394 = ssub.s32 1664, 1664
          %395 = vsyncadd %s385, %s394
          %s396 = smul.addr %s392, 13
          %s397 = smul.addr %s396, 128
          %s398 = scalar_lea.hbm %s2, %s397
          %s399 = sshll.u32 %s388, 4
          %s400 = int_to_ptr.vmem [resolvable:$true] %s399
          %405 = dma.vmem_to_hbm [thread:$0]  %s400, 1664, %s398, %s385, 128, 128, 8
        $region44: #{tpu_custom_call.1} parent=27 // pred_fallthru
          _
      $region28: #{tpu_custom_call.1} parent=5 // pred_fallthru
        _
      %p406 = scmp.le.s32.totalorder 2, %s17
      // Predicated region
      $region45: #{tpu_custom_call.1} parent=5 // pred_check
        %p407 = pneg %p406
      $region46: #{tpu_custom_call.1} parent=5 // pred_check_branch
        %409 = sbr.rel (%p407) target = $region48
      $region47: #{tpu_custom_call.1} parent=5 // pred_region
        %s410 = ssub.s32 %s17, 2
        // Predicated region
        $region49: #{tpu_custom_call.1} parent=47 // pred_check
          %p411 = pneg %p127
        $region50: #{tpu_custom_call.1} parent=47 // pred_check_branch
          %413 = sbr.rel (%p411) target = $region52
        $region51: #{tpu_custom_call.1} parent=47 // pred_region
          %s414 = sand.u32 %s112, 1
          %s415 = scalar_lea.sflag [#allocation4], %s414
          %s416 = sand.u32 %s112, 1
          %s417 = smul.addr %s416, 104
          %s418 = scalar_lea.vmem [#allocation7], %s417
          %419 = dma.done %s415, 1664
        $region52: #{tpu_custom_call.1} parent=47 // pred_fallthru
          _
      $region48: #{tpu_custom_call.1} parent=5 // pred_fallthru
        _
    $region6: #{tpu_custom_call.1} parent=1 // loop_footer
      %s21 = sadd.s32 1, %s17
    $region7: #{tpu_custom_call.1} parent=1 // loop_footer_branch
      %16 = sbr.rel target = $region3
    $region8: #{tpu_custom_call.1} parent=1 // loop_exit
      _
    %420 = vsyncpa [#allocation3], 1
    %s421 = scalar_lea.sflag [#allocation3], 1
    %422 = vsyncpa %s421, 1
    %423 = vsyncpa [#allocation6], 1
    %s424 = scalar_lea.sflag [#allocation6], 1
    %425 = vsyncpa %s424, 1
    %426 = vsyncpa [#allocation4], 1
    %s427 = scalar_lea.sflag [#allocation4], 1
    %428 = vsyncpa %s427, 1

</llo_original>
